<compile_context>
chip_gen: v5e
topology: v5e:2x2
jax: 0.10.0
libtpu: 0.0.40
codegen_flags: <defaults>
</compile_context>

<pallas_src>
import jax
import jax.numpy as jnp
from jax.experimental import pallas as pl
from jax.experimental.pallas import tpu as pltpu

IN_DIM = 10
HID_DIM = 20
OUT_DIM = 7

# Below this batch size a plain XLA fusion beats pallas_call launch overhead.
MIN_PALLAS_BATCH = 4096


def _round_up(n, m):
    return ((n + m - 1) // m) * m


def mlp_kernel(x_ref, w1t_ref, b1_ref, w2t_ref, b2_ref, o_ref):
    # Layer 1: (tb, IN)bf16 @ (IN, HID)bf16 -> (tb, HID) f32 on the MXU.
    x = x_ref[...].astype(jnp.bfloat16)
    h = jnp.dot(x, w1t_ref[...], preferred_element_type=jnp.float32)
    h = jnp.maximum(h + b1_ref[...], 0.0)                     # bias + ReLU on the VPU
    # Layer 2: (tb, HID)bf16 @ (HID, OUT)bf16 -> (tb, OUT) f32 (bf16 operands help v5e).
    y = jnp.dot(h.astype(jnp.bfloat16), w2t_ref[...], preferred_element_type=jnp.float32)
    y = y + b2_ref[...]
    # Stable sigmoid: z = exp(-|y|) is in (0, 1], so 1+z is in (1, 2] -> approx
    # reciprocal (EUP, off the VALU slots) is safe even for huge |y|.
    z = jnp.exp(-jnp.abs(y))
    inv = pl.reciprocal(1.0 + z, approx=True)
    sig = jnp.where(y >= 0.0, inv, z * inv)
    o_ref[...] = sig.astype(o_ref.dtype)


def mlp_forward_pallas(x, params, *, tile_batch=4096, out_dtype=jnp.bfloat16):
    """x: (B, IN_DIM) float32 -> (B, OUT_DIM) out_dtype (bf16 by default)."""
    w1, b1, w2, b2 = params  # PyTorch layout: w1 (HID, IN), b1 (HID,), w2 (OUT, HID), b2 (OUT,)
    B = x.shape[0]

    tb = int(tile_batch)
    assert tb % 128 == 0, "batch tile must be a multiple of 128 (sublane/lane alignment)"
    if B >= 256:
        # Cap the tile so the (parallel) grid has >= 2 steps: on v7x that is what
        # shards batch tiles across the two TensorCores (no-op on v5e/v6e).
        tb = min(tb, _round_up(pl.cdiv(B, 2), 128))
    else:
        tb = 128
    grid = (pl.cdiv(B, tb),)  # ragged last block is masked by Pallas; no padding pass

    # Tiny weight prep (negligible HBM traffic): transpose to contraction-friendly
    # layout, bf16 for the MXU; biases stay f32 as (1, features) rows.
    w1t = w1.T.astype(jnp.bfloat16)                  # (IN, HID)
    w2t = w2.T.astype(jnp.bfloat16)                  # (HID, OUT)
    b1r = b1.reshape(1, HID_DIM).astype(jnp.float32)
    b2r = b2.reshape(1, OUT_DIM).astype(jnp.float32)

    return pl.pallas_call(
        mlp_kernel,
        out_shape=jax.ShapeDtypeStruct((B, OUT_DIM), out_dtype),
        grid=grid,
        in_specs=[
            pl.BlockSpec((tb, IN_DIM), lambda i: (i, 0)),        # x tile, streamed per step
            pl.BlockSpec((IN_DIM, HID_DIM), lambda i: (0, 0)),   # weights/biases stay resident
            pl.BlockSpec((1, HID_DIM), lambda i: (0, 0)),
            pl.BlockSpec((HID_DIM, OUT_DIM), lambda i: (0, 0)),
            pl.BlockSpec((1, OUT_DIM), lambda i: (0, 0)),
        ],
        out_specs=pl.BlockSpec((tb, OUT_DIM), lambda i: (i, 0)),
        compiler_params=pltpu.CompilerParams(
            dimension_semantics=("parallel",),  # batch tiles are independent
        ),
    )(x, w1t, b1r, w2t, b2r)


def mlp_forward_ref(x, params):
    """Plain-JAX reference; also the small-batch path (XLA fuses this trivially)."""
    w1, b1, w2, b2 = params
    h = jnp.maximum(x @ w1.T + b1, 0.0)
    return jax.nn.sigmoid(h @ w2.T + b2)


def mlp_forward(x, params, *, tile_batch=4096, out_dtype=jnp.bfloat16):
    if x.shape[0] < MIN_PALLAS_BATCH:
        return mlp_forward_ref(x, params).astype(out_dtype)
    return mlp_forward_pallas(x, params, tile_batch=tile_batch, out_dtype=out_dtype)


def init_params(key):
    # PyTorch nn.Linear default init: U(-1/sqrt(fan_in), 1/sqrt(fan_in)); PyTorch layout.
    k1, k2, k3, k4 = jax.random.split(key, 4)
    bound1 = 1.0 / jnp.sqrt(IN_DIM)
    bound2 = 1.0 / jnp.sqrt(HID_DIM)
    w1 = jax.random.uniform(k1, (HID_DIM, IN_DIM), jnp.float32, -bound1, bound1)
    b1 = jax.random.uniform(k2, (HID_DIM,), jnp.float32, -bound1, bound1)
    w2 = jax.random.uniform(k3, (OUT_DIM, HID_DIM), jnp.float32, -bound2, bound2)
    b2 = jax.random.uniform(k4, (OUT_DIM,), jnp.float32, -bound2, bound2)
    return w1, b1, w2, b2


if __name__ == "__main__":
    key = jax.random.PRNGKey(0)
    kx, kp = jax.random.split(key)
    params = init_params(kp)

    # Batch deliberately NOT a multiple of the tile: exercises a 2-step grid plus the
    # ragged (masked) last block, with no padding/transpose ops in the wrapper.
    batch = 300
    x = jax.random.normal(kx, (batch, IN_DIM), jnp.float32)

    out = mlp_forward_pallas(x, params, tile_batch=256)
    jax.block_until_ready(out)

    ref = mlp_forward_ref(x, params)
    assert out.shape == (batch, OUT_DIM)
    assert jnp.allclose(out.astype(jnp.float32), ref, atol=2e-2), "mismatch vs reference"

    # Tiny-batch call stays on the fused XLA path (kernel would be pure launch overhead).
    small = mlp_forward(x[:8], params)
    assert jnp.allclose(small.astype(jnp.float32), ref[:8], atol=2e-2)

    print("KERNEL_OK")
</pallas_src>

<mosaic_0001>
module attributes {stable_mosaic.version = 11 : i64} {
  func.func @mlp_kernel(%arg0: i32, %arg1: memref<256x10xf32, #tpu.memory_space<vmem>>, %arg2: memref<10x20xbf16, #tpu.memory_space<vmem>>, %arg3: memref<1x20xf32, #tpu.memory_space<vmem>>, %arg4: memref<20x7xbf16, #tpu.memory_space<vmem>>, %arg5: memref<1x7xf32, #tpu.memory_space<vmem>>, %arg6: memref<256x7xbf16, #tpu.memory_space<vmem>>) attributes {dimension_semantics = [#tpu.dimension_semantics<parallel>], iteration_bounds = array<i64: 2>, scalar_prefetch = 0 : i64, scratch_operands = 0 : i64, tpu.core_type = #tpu.core_type<tc>, window_params = [{transform_indices = @transform_0, window_bounds = array<i64: 256, 10>}, {pipeline_mode = #tpu.pipeline_mode<synchronous>, transform_indices = @transform_1, window_bounds = array<i64: 10, 20>}, {pipeline_mode = #tpu.pipeline_mode<synchronous>, transform_indices = @transform_2, window_bounds = array<i64: 1, 20>}, {pipeline_mode = #tpu.pipeline_mode<synchronous>, transform_indices = @transform_3, window_bounds = array<i64: 20, 7>}, {pipeline_mode = #tpu.pipeline_mode<synchronous>, transform_indices = @transform_4, window_bounds = array<i64: 1, 7>}, {transform_indices = @transform_5, window_bounds = array<i64: 256, 7>}]} {
    %c0 = arith.constant 0 : index
    %c0_0 = arith.constant 0 : index
    %0 = vector.load %arg1[%c0, %c0_0] : memref<256x10xf32, #tpu.memory_space<vmem>>, vector<256x10xf32>
    %1 = arith.truncf %0 : vector<256x10xf32> to vector<256x10xbf16>
    %c0_1 = arith.constant 0 : index
    %c0_2 = arith.constant 0 : index
    %2 = vector.load %arg2[%c0_1, %c0_2] : memref<10x20xbf16, #tpu.memory_space<vmem>>, vector<10x20xbf16>
    %cst = arith.constant dense<0.000000e+00> : vector<256x20xf32>
    %3 = tpu.matmul %1, %2, %cst {dimension_numbers = #tpu.dot_dimension_numbers<[1], [0], [0], [1], [0, 0, 1, 1], [], []>} : vector<256x10xbf16>, vector<10x20xbf16>, vector<256x20xf32> -> vector<256x20xf32>
    %c0_3 = arith.constant 0 : index
    %c0_4 = arith.constant 0 : index
    %4 = vector.load %arg3[%c0_3, %c0_4] : memref<1x20xf32, #tpu.memory_space<vmem>>, vector<1x20xf32>
    %5 = vector.broadcast %4 : vector<1x20xf32> to vector<256x20xf32>
    %6 = arith.addf %3, %5 : vector<256x20xf32>
    %cst_5 = arith.constant 0.000000e+00 : f32
    %7 = vector.broadcast %cst_5 : f32 to vector<256x20xf32>
    %8 = arith.maximumf %6, %7 : vector<256x20xf32>
    %9 = arith.truncf %8 : vector<256x20xf32> to vector<256x20xbf16>
    %c0_6 = arith.constant 0 : index
    %c0_7 = arith.constant 0 : index
    %10 = vector.load %arg4[%c0_6, %c0_7] : memref<20x7xbf16, #tpu.memory_space<vmem>>, vector<20x7xbf16>
    %cst_8 = arith.constant dense<0.000000e+00> : vector<256x7xf32>
    %11 = tpu.matmul %9, %10, %cst_8 {dimension_numbers = #tpu.dot_dimension_numbers<[1], [0], [0], [1], [0, 0, 1, 1], [], []>} : vector<256x20xbf16>, vector<20x7xbf16>, vector<256x7xf32> -> vector<256x7xf32>
    %c0_9 = arith.constant 0 : index
    %c0_10 = arith.constant 0 : index
    %12 = vector.load %arg5[%c0_9, %c0_10] : memref<1x7xf32, #tpu.memory_space<vmem>>, vector<1x7xf32>
    %13 = vector.broadcast %12 : vector<1x7xf32> to vector<256x7xf32>
    %14 = arith.addf %11, %13 : vector<256x7xf32>
    %15 = math.absf %14 : vector<256x7xf32>
    %cst_11 = arith.constant 0.000000e+00 : f32
    %16 = vector.broadcast %cst_11 : f32 to vector<256x7xf32>
    %17 = arith.subf %16, %15 : vector<256x7xf32>
    %18 = math.exp %17 : vector<256x7xf32>
    %cst_12 = arith.constant 1.000000e+00 : f32
    %19 = vector.broadcast %cst_12 : f32 to vector<256x7xf32>
    %20 = arith.addf %19, %18 : vector<256x7xf32>
    %21 = tpu.reciprocal %20 {approx = true} : vector<256x7xf32> -> vector<256x7xf32>
    %cst_13 = arith.constant 0.000000e+00 : f32
    %22 = vector.broadcast %cst_13 : f32 to vector<256x7xf32>
    %23 = arith.cmpf oge, %14, %22 : vector<256x7xf32>
    %24 = arith.mulf %18, %21 : vector<256x7xf32>
    %25 = arith.select %23, %21, %24 : vector<256x7xi1>, vector<256x7xf32>
    %26 = arith.truncf %25 : vector<256x7xf32> to vector<256x7xbf16>
    %c0_14 = arith.constant 0 : index
    %c0_15 = arith.constant 0 : index
    %27 = vector.load %arg6[%c0_14, %c0_15] : memref<256x7xbf16, #tpu.memory_space<vmem>>, vector<256x7xbf16>
    tpu.vector_store %arg6[%c0_14, %c0_15], %26 {strides = array<i32>} : memref<256x7xbf16, #tpu.memory_space<vmem>>, vector<256x7xbf16>,
    return
  }
  func.func @transform_0(%arg0: i32) -> (i32, i32) {
    %c0_i32 = arith.constant 0 : i32
    %c0_i32_0 = arith.constant 0 : i32
    return %arg0, %c0_i32 : i32, i32
  }
  func.func @transform_1(%arg0: i32) -> (i32, i32) {
    %c0_i32 = arith.constant 0 : i32
    %c0_i32_0 = arith.constant 0 : i32
    %c0_i32_1 = arith.constant 0 : i32
    return %c0_i32, %c0_i32_0 : i32, i32
  }
  func.func @transform_2(%arg0: i32) -> (i32, i32) {
    %c0_i32 = arith.constant 0 : i32
    %c0_i32_0 = arith.constant 0 : i32
    %c0_i32_1 = arith.constant 0 : i32
    return %c0_i32, %c0_i32_0 : i32, i32
  }
  func.func @transform_3(%arg0: i32) -> (i32, i32) {
    %c0_i32 = arith.constant 0 : i32
    %c0_i32_0 = arith.constant 0 : i32
    %c0_i32_1 = arith.constant 0 : i32
    return %c0_i32, %c0_i32_0 : i32, i32
  }
  func.func @transform_4(%arg0: i32) -> (i32, i32) {
    %c0_i32 = arith.constant 0 : i32
    %c0_i32_0 = arith.constant 0 : i32
    %c0_i32_1 = arith.constant 0 : i32
    return %c0_i32, %c0_i32_0 : i32, i32
  }
  func.func @transform_5(%arg0: i32) -> (i32, i32) {
    %c0_i32 = arith.constant 0 : i32
    %c0_i32_0 = arith.constant 0 : i32
    return %arg0, %c0_i32 : i32, i32
  }
}

</mosaic_0001>

<llo_original>
// kernel: tpu_custom_call.1
$region0: #{tpu_custom_call.1}
  #allocation0 [shape = 'u32[]', space=smem, size = 0x4, offset = 0x4, fixed_abs, tag = 'smem constant byte address 0x4 - core index']
  #allocation1 [shape = 'u32[72,128]{1,0:T(1,128)}', space=vmem, size = 0x9000, scoped, tag = 'internal scratch']
  %s0 = inlined_call_operand.vmem [shape: f32[300,10], index: 0, kind: input, shape index: {}]
  %s1 = inlined_call_operand.vmem [shape: bf16[10,20], index: 1, kind: input, shape index: {}]
  %s2 = inlined_call_operand.vmem [shape: f32[1,20], index: 2, kind: input, shape index: {}]
  %s3 = inlined_call_operand.vmem [shape: bf16[20,7], index: 3, kind: input, shape index: {}]
  %s4 = inlined_call_operand.vmem [shape: f32[1,7], index: 4, kind: input, shape index: {}]
  %s5 = inlined_call_operand.vmem [shape: bf16[300,7], index: 5, kind: output, shape index: {}]
  %s6 = sld [smem:[#allocation0]]
  $region97: #{tpu_custom_call.1} parent=0
    _
  %s8 = ssub.s32 1, %s6
  %s9 = scalar_select 0, %s8, %s6
  $region1: #{tpu_custom_call.1} parent=0
    #allocation2 [shape = 'u8[131072]{0}', space=vmem, size = 0x20000, scoped, tag = 'output window, operand 0']
    loop: start=0, step=1, limit=4
    $region2: #{tpu_custom_call.1} parent=1 // loop_pre_header
      _
    $region3: #{tpu_custom_call.1} parent=1 // loop_header
      %s11 = sphi 0, %s15
      %p12 = scmp.ge.s32.totalorder %s11, 4
      %s21 = sphi 0, %s23
      %s24 = sphi 0, %s21
      %s25 = sphi 0, %s24
      %s41 = sphi 0, %s25
      %s45 = sphi 0, %s45
      %s47 = sphi 0, %s45
      %s48 = sphi 0, %s47
      %s62 = sphi 0, %s48
      %s66 = sphi 0, %s66
      %s68 = sphi 0, %s66
      %s69 = sphi 0, %s68
      %s83 = sphi 0, %s69
      %s87 = sphi 0, %s87
      %s89 = sphi 0, %s87
      %s90 = sphi 0, %s89
      %s104 = sphi 0, %s90
      %s108 = sphi 0, %s108
      %s110 = sphi 0, %s108
      %s111 = sphi 0, %s110
      %s125 = sphi 0, %s111
      %s131 = sphi 0, %s133
      %s134 = sphi 0, %s131
      %s135 = sphi 0, %s134
      %s151 = sphi 0, %s135
    $region4: #{tpu_custom_call.1} parent=1 // loop_header_branch
      %14 = sbr.rel (%p12) target = $region8
    $region5: #{tpu_custom_call.1} parent=1 // loop_body
      %s16 = ssub.s32 %s11, 1
      %s17 = ssub.s32 %s11, 2
      %s18 = sadd.s32 %s11, 1
      %s19 = ssub.s32 %s11, %s18
      %p20 = scmp.eq.s32.totalorder %s19, 0
      %s22 = sadd.s32 %s21, 1
      %s23 = scalar_select %p20, %s21, %s22
      %p26 = pneg %p20
      %p27 = scmp.eq.s32.totalorder %s11, 1
      %p28 = por %p26, %p27
      %p29 = scmp.ne.s32.totalorder %s21, %s24
      %p30 = scmp.eq.s32.totalorder %s11, 0
      %p31 = por %p29, %p30
      %p32 = scmp.ne.s32.totalorder %s21, %s24
      %p33 = scmp.eq.s32.totalorder %s16, 1
      %p34 = por %p32, %p33
      %p35 = scmp.ne.s32.totalorder %s24, %s25
      %p36 = scmp.eq.s32.totalorder %s16, 0
      %p37 = por %p35, %p36
      %p38 = scmp.ne.s32.totalorder %s24, %s25
      %p39 = scmp.eq.s32.totalorder %s17, 1
      %p40 = por %p38, %p39
      %p42 = scmp.ne.s32.totalorder %s25, %s41
      %p43 = scmp.eq.s32.totalorder %s17, 0
      %p44 = por %p42, %p43
      %s46 = sadd.s32 %s45, 1
      %p49 = scmp.eq.s32.totalorder %s11, 1
      %p50 = scmp.ne.s32.totalorder %s45, %s47
      %p51 = scmp.eq.s32.totalorder %s11, 0
      %p52 = por %p50, %p51
      %p53 = scmp.ne.s32.totalorder %s45, %s47
      %p54 = scmp.eq.s32.totalorder %s16, 1
      %p55 = por %p53, %p54
      %p56 = scmp.ne.s32.totalorder %s47, %s48
      %p57 = scmp.eq.s32.totalorder %s16, 0
      %p58 = por %p56, %p57
      %p59 = scmp.ne.s32.totalorder %s47, %s48
      %p60 = scmp.eq.s32.totalorder %s17, 1
      %p61 = por %p59, %p60
      %p63 = scmp.ne.s32.totalorder %s48, %s62
      %p64 = scmp.eq.s32.totalorder %s17, 0
      %p65 = por %p63, %p64
      %s67 = sadd.s32 %s66, 1
      %p70 = scmp.eq.s32.totalorder %s11, 1
      %p71 = scmp.ne.s32.totalorder %s66, %s68
      %p72 = scmp.eq.s32.totalorder %s11, 0
      %p73 = por %p71, %p72
      %p74 = scmp.ne.s32.totalorder %s66, %s68
      %p75 = scmp.eq.s32.totalorder %s16, 1
      %p76 = por %p74, %p75
      %p77 = scmp.ne.s32.totalorder %s68, %s69
      %p78 = scmp.eq.s32.totalorder %s16, 0
      %p79 = por %p77, %p78
      %p80 = scmp.ne.s32.totalorder %s68, %s69
      %p81 = scmp.eq.s32.totalorder %s17, 1
      %p82 = por %p80, %p81
      %p84 = scmp.ne.s32.totalorder %s69, %s83
      %p85 = scmp.eq.s32.totalorder %s17, 0
      %p86 = por %p84, %p85
      %s88 = sadd.s32 %s87, 1
      %p91 = scmp.eq.s32.totalorder %s11, 1
      %p92 = scmp.ne.s32.totalorder %s87, %s89
      %p93 = scmp.eq.s32.totalorder %s11, 0
      %p94 = por %p92, %p93
      %p95 = scmp.ne.s32.totalorder %s87, %s89
      %p96 = scmp.eq.s32.totalorder %s16, 1
      %p97 = por %p95, %p96
      %p98 = scmp.ne.s32.totalorder %s89, %s90
      %p99 = scmp.eq.s32.totalorder %s16, 0
      %p100 = por %p98, %p99
      %p101 = scmp.ne.s32.totalorder %s89, %s90
      %p102 = scmp.eq.s32.totalorder %s17, 1
      %p103 = por %p101, %p102
      %p105 = scmp.ne.s32.totalorder %s90, %s104
      %p106 = scmp.eq.s32.totalorder %s17, 0
      %p107 = por %p105, %p106
      %s109 = sadd.s32 %s108, 1
      %p112 = scmp.eq.s32.totalorder %s11, 1
      %p113 = scmp.ne.s32.totalorder %s108, %s110
      %p114 = scmp.eq.s32.totalorder %s11, 0
      %p115 = por %p113, %p114
      %p116 = scmp.ne.s32.totalorder %s108, %s110
      %p117 = scmp.eq.s32.totalorder %s16, 1
      %p118 = por %p116, %p117
      %p119 = scmp.ne.s32.totalorder %s110, %s111
      %p120 = scmp.eq.s32.totalorder %s16, 0
      %p121 = por %p119, %p120
      %p122 = scmp.ne.s32.totalorder %s110, %s111
      %p123 = scmp.eq.s32.totalorder %s17, 1
      %p124 = por %p122, %p123
      %p126 = scmp.ne.s32.totalorder %s111, %s125
      %p127 = scmp.eq.s32.totalorder %s17, 0
      %p128 = por %p126, %p127
      %s129 = ssub.s32 %s11, %s18
      %p130 = scmp.eq.s32.totalorder %s129, 0
      %s132 = sadd.s32 %s131, 1
      %s133 = scalar_select %p130, %s131, %s132
      %p136 = pneg %p130
      %p137 = scmp.eq.s32.totalorder %s11, 1
      %p138 = por %p136, %p137
      %p139 = scmp.ne.s32.totalorder %s131, %s134
      %p140 = scmp.eq.s32.totalorder %s11, 0
      %p141 = por %p139, %p140
      %p142 = scmp.ne.s32.totalorder %s131, %s134
      %p143 = scmp.eq.s32.totalorder %s16, 1
      %p144 = por %p142, %p143
      %p145 = scmp.ne.s32.totalorder %s134, %s135
      %p146 = scmp.eq.s32.totalorder %s16, 0
      %p147 = por %p145, %p146
      %p148 = scmp.ne.s32.totalorder %s134, %s135
      %p149 = scmp.eq.s32.totalorder %s17, 1
      %p150 = por %p148, %p149
      %p152 = scmp.ne.s32.totalorder %s135, %s151
      %p153 = scmp.eq.s32.totalorder %s17, 0
      %p154 = por %p152, %p153
      %p155 = scmp.le.s32.totalorder 1, %s11
      %p156 = scmp.lt.s32.totalorder %s11, 3
      %p157 = pnand %p155, %p156
      %p158 = pneg %p157
      // Predicated region
      $region9: #{tpu_custom_call.1} parent=5 // pred_check
        _
      $region10: #{tpu_custom_call.1} parent=5 // pred_check_branch
        %160 = sbr.rel (%p157) target = $region12
      $region11: #{tpu_custom_call.1} parent=5 // pred_region
        %s161 = ssub.s32 %s11, 1
        // Predicated region
        $region13: #{tpu_custom_call.1} parent=11 // pred_check
          %p162 = pneg %p58
        $region14: #{tpu_custom_call.1} parent=11 // pred_check_branch
          %164 = sbr.rel (%p162) target = $region16
        $region15: #{tpu_custom_call.1} parent=11 // pred_region
          _
        $region16: #{tpu_custom_call.1} parent=11 // pred_fallthru
          _
        // Predicated region
        $region17: #{tpu_custom_call.1} parent=11 // pred_check
          %p165 = pneg %p79
        $region18: #{tpu_custom_call.1} parent=11 // pred_check_branch
          %167 = sbr.rel (%p165) target = $region20
        $region19: #{tpu_custom_call.1} parent=11 // pred_region
          _
        $region20: #{tpu_custom_call.1} parent=11 // pred_fallthru
          _
        // Predicated region
        $region21: #{tpu_custom_call.1} parent=11 // pred_check
          %p168 = pneg %p100
        $region22: #{tpu_custom_call.1} parent=11 // pred_check_branch
          %170 = sbr.rel (%p168) target = $region24
        $region23: #{tpu_custom_call.1} parent=11 // pred_region
          _
        $region24: #{tpu_custom_call.1} parent=11 // pred_fallthru
          _
        // Predicated region
        $region25: #{tpu_custom_call.1} parent=11 // pred_check
          %p171 = pneg %p121
        $region26: #{tpu_custom_call.1} parent=11 // pred_check_branch
          %173 = sbr.rel (%p171) target = $region28
        $region27: #{tpu_custom_call.1} parent=11 // pred_region
          _
        $region28: #{tpu_custom_call.1} parent=11 // pred_fallthru
          _
      $region12: #{tpu_custom_call.1} parent=5 // pred_fallthru
        _
      %p174 = scmp.lt.s32.totalorder %s11, 2
      // Predicated region
      $region29: #{tpu_custom_call.1} parent=5 // pred_check
        %p175 = pneg %p174
      $region30: #{tpu_custom_call.1} parent=5 // pred_check_branch
        %177 = sbr.rel (%p175) target = $region32
      $region31: #{tpu_custom_call.1} parent=5 // pred_region
        // Predicated region
        $region33: #{tpu_custom_call.1} parent=31 // pred_check
          %p178 = pneg %p31
        $region34: #{tpu_custom_call.1} parent=31 // pred_check_branch
          %180 = sbr.rel (%p178) target = $region36
        $region35: #{tpu_custom_call.1} parent=31 // pred_region
          %s181 = smul.u32 32, %s11
          %s182 = ssub.s32 38, %s181
          %p183 = scmp.lt.s32.totalorder %s182, 32
          %s184 = scalar_select %p183, %s182, 32
          %s185 = smul.u32 8, %s184
          %p186 = scmp.lt.s32.totalorder %s181, 37
          %s187 = scalar_select %p186, %s181, 37
          %s188 = smul.addr %s187, 8
          %s189 = scalar_lea.vmem %s0, %s188
          %s190 = smul.u32 32, %s11
          %s191 = ssub.s32 38, %s190
          %p192 = scmp.lt.s32.totalorder %s191, 32
          %s193 = scalar_select %p192, %s191, 32
          %s194 = smul.u32 8, %s193
        $region36: #{tpu_custom_call.1} parent=31 // pred_fallthru
          _
      $region32: #{tpu_custom_call.1} parent=5 // pred_fallthru
        _
      %p195 = scmp.le.s32.totalorder 1, %s11
      %p196 = scmp.lt.s32.totalorder %s11, 3
      %p197 = pnand %p195, %p196
      %p198 = pneg %p197
      // Predicated region
      $region37: #{tpu_custom_call.1} parent=5 // pred_check
        _
      $region38: #{tpu_custom_call.1} parent=5 // pred_check_branch
        %200 = sbr.rel (%p197) target = $region40
      $region39: #{tpu_custom_call.1} parent=5 // pred_region
        %s201 = ssub.s32 %s11, 1
        %s202 = smul.u32 32, %s16
        %s203 = ssub.s32 38, %s202
        %p204 = scmp.lt.s32.totalorder %s203, 32
        %s205 = scalar_select %p204, %s203, 32
        %s206 = smul.u32 8, %s205
        %p207 = scmp.lt.s32.totalorder %s202, 37
        %s208 = scalar_select %p207, %s202, 37
        %s209 = smul.addr %s208, 8
        %s210 = scalar_lea.vmem %s0, %s209
        %p211 = pneg %p37
        %p212 = pneg %p34
        %p213 = pneg %p58
        %p214 = pneg %p55
        %p215 = pneg %p79
        %p216 = pneg %p76
        %p217 = pneg %p100
        %p218 = pneg %p97
        %p219 = pneg %p121
        %p220 = pneg %p118
        %p221 = pneg %p147
        %p222 = pneg %p144
        %s223 = sand.u32 %s134, 1
        %s224 = sand.u32 %s134, 1
        %s225 = smul.addr %s224, 128
        %s226 = scalar_lea.vmem [#allocation2], %s225
        %s227 = smul.u32 32, %s16
        %s228 = ssub.s32 38, %s227
        %p229 = scmp.lt.s32.totalorder %s228, 32
        %s230 = scalar_select %p229, %s228, 32
        %s231 = smul.u32 8, %s230
        %p232 = scmp.lt.s32.totalorder %s227, 37
        %s233 = scalar_select %p232, %s227, 37
        %s234 = smul.addr %s233, 8
        %s235 = scalar_lea.vmem %s0, %s234
        %s236 = smul.u32 32, %s16
        %s237 = ssub.s32 38, %s236
        %p238 = scmp.lt.s32.totalorder %s237, 32
        %s239 = scalar_select %p238, %s237, 32
        %s240 = smul.u32 8, %s239
        %s241 = smul.u32 32, %s16
        %s242 = ssub.s32 38, %s241
        %p243 = scmp.lt.s32.totalorder %s242, 32
        %s244 = scalar_select %p243, %s242, 32
        %s245 = smul.u32 4, %s244
        %v247 = vld [vmem:[%s235] sm:$0xff]
        %v248 = vld [vmem:[%s235 + $0x8] sm:$0xff]
        %v249 = vld [vmem:[%s235 + $0x10] sm:$0xff]
        %v250 = vld [vmem:[%s235 + $0x18] sm:$0xff]
        %v251 = vld [vmem:[%s235 + $0x20] sm:$0xff]
        %v252 = vld [vmem:[%s235 + $0x28] sm:$0xff]
        %v253 = vld [vmem:[%s235 + $0x30] sm:$0xff]
        %v254 = vld [vmem:[%s235 + $0x38] sm:$0xff]
        %v255 = vld [vmem:[%s235 + $0x40] sm:$0xff]
        %v256 = vld [vmem:[%s235 + $0x48] sm:$0xff]
        %v257 = vld [vmem:[%s235 + $0x50] sm:$0xff]
        %v258 = vld [vmem:[%s235 + $0x58] sm:$0xff]
        %v259 = vld [vmem:[%s235 + $0x60] sm:$0xff]
        %v260 = vld [vmem:[%s235 + $0x68] sm:$0xff]
        %v261 = vld [vmem:[%s235 + $0x70] sm:$0xff]
        %v262 = vld [vmem:[%s235 + $0x78] sm:$0xff]
        %v263 = vld [vmem:[%s235 + $0x80] sm:$0xff]
        %v264 = vld [vmem:[%s235 + $0x88] sm:$0xff]
        %v265 = vld [vmem:[%s235 + $0x90] sm:$0xff]
        %v266 = vld [vmem:[%s235 + $0x98] sm:$0xff]
        %v267 = vld [vmem:[%s235 + $0xa0] sm:$0xff]
        %v268 = vld [vmem:[%s235 + $0xa8] sm:$0xff]
        %v269 = vld [vmem:[%s235 + $0xb0] sm:$0xff]
        %v270 = vld [vmem:[%s235 + $0xb8] sm:$0xff]
        %v271 = vld [vmem:[%s235 + $0xc0] sm:$0xff]
        %v272 = vld [vmem:[%s235 + $0xc8] sm:$0xff]
        %v273 = vld [vmem:[%s235 + $0xd0] sm:$0xff]
        %v274 = vld [vmem:[%s235 + $0xd8] sm:$0xff]
        %v275 = vld [vmem:[%s235 + $0xe0] sm:$0xff]
        %v276 = vld [vmem:[%s235 + $0xe8] sm:$0xff]
        %v277 = vld [vmem:[%s235 + $0xf0] sm:$0xff]
        %v278 = vld [vmem:[%s235 + $0xf8] sm:$0xff]
        %v279 = vpack.c.bf16 %v248, %v247
        %v280 = vpack.c.bf16 %v250, %v249
        %v281 = vpack.c.bf16 %v252, %v251
        %v282 = vpack.c.bf16 %v254, %v253
        %v283 = vpack.c.bf16 %v256, %v255
        %v284 = vpack.c.bf16 %v258, %v257
        %v285 = vpack.c.bf16 %v260, %v259
        %v286 = vpack.c.bf16 %v262, %v261
        %v287 = vpack.c.bf16 %v264, %v263
        %v288 = vpack.c.bf16 %v266, %v265
        %v289 = vpack.c.bf16 %v268, %v267
        %v290 = vpack.c.bf16 %v270, %v269
        %v291 = vpack.c.bf16 %v272, %v271
        %v292 = vpack.c.bf16 %v274, %v273
        %v293 = vpack.c.bf16 %v276, %v275
        %v294 = vpack.c.bf16 %v278, %v277
        %v295 = vld [vmem:[%s1] sm:$0xf]
        %v296 = vld [vmem:[%s1 + $0x4] sm:$0x1]
        %v297 = vld [vmem:[%s2] sm:$0x1]
        %v299 = vperm.slane %v297, 0
        %v303 = vunpack.c.l.b16 %v295
        %v304 = vunpack.c.l.b16 %v296
        %v305 = vpack.c.b16 %v304, %v303
        %vm306 = vcmask 80896
        %v308 = vsel %vm306, %v279, 0
        %v311 = vsel %vm306, %v280, 0
        %v314 = vsel %vm306, %v281, 0
        %v317 = vsel %vm306, %v282, 0
        %v320 = vsel %vm306, %v283, 0
        %v323 = vsel %vm306, %v284, 0
        %v326 = vsel %vm306, %v285, 0
        %v329 = vsel %vm306, %v286, 0
        %v332 = vsel %vm306, %v287, 0
        %v335 = vsel %vm306, %v288, 0
        %v338 = vsel %vm306, %v289, 0
        %v341 = vsel %vm306, %v290, 0
        %v344 = vsel %vm306, %v291, 0
        %v347 = vsel %vm306, %v292, 0
        %v350 = vsel %vm306, %v293, 0
        %v353 = vsel %vm306, %v294, 0
        %vm355 = vcmask 1044480
        %v357 = vsel %vm355, %v305, 0
        %359 = vmatpush.bf16.msra.mxu0 0
        %360 = vmatpush.bf16.msra.mxu0 0
        %361 = vmatpush.bf16.msra.mxu0 0
        %362 = vmatpush.bf16.msra.mxu0 0
        %363 = vmatpush.bf16.msra.mxu0 0
        %364 = vmatpush.bf16.msra.mxu0 0
        %365 = vmatpush.bf16.msra.mxu0 0
        %366 = vmatpush.bf16.msra.mxu0 %v357
        %367 = vmatmul.bf16.gmra.mxu0 %v308
        %v368 = vpop.f32.mrf.mxu0
        %v369 = vadd.f32 %v299, %v368
        %v370 = vpop.f32.mrf.mxu0
        %v371 = vadd.f32 %v299, %v370
        %372 = vmatmul.bf16.gmra.mxu0 %v311
        %v373 = vpop.f32.mrf.mxu0
        %v374 = vadd.f32 %v299, %v373
        %v375 = vpop.f32.mrf.mxu0
        %v376 = vadd.f32 %v299, %v375
        %377 = vmatmul.bf16.gmra.mxu0 %v314
        %v378 = vpop.f32.mrf.mxu0
        %v379 = vadd.f32 %v299, %v378
        %v380 = vpop.f32.mrf.mxu0
        %v381 = vadd.f32 %v299, %v380
        %382 = vmatmul.bf16.gmra.mxu0 %v317
        %v383 = vpop.f32.mrf.mxu0
        %v384 = vadd.f32 %v299, %v383
        %v385 = vpop.f32.mrf.mxu0
        %v386 = vadd.f32 %v299, %v385
        %387 = vmatmul.bf16.gmra.mxu0 %v320
        %v388 = vpop.f32.mrf.mxu0
        %v389 = vadd.f32 %v299, %v388
        %v390 = vpop.f32.mrf.mxu0
        %v391 = vadd.f32 %v299, %v390
        %392 = vmatmul.bf16.gmra.mxu0 %v323
        %v393 = vpop.f32.mrf.mxu0
        %v394 = vadd.f32 %v299, %v393
        %v395 = vpop.f32.mrf.mxu0
        %v396 = vadd.f32 %v299, %v395
        %397 = vmatmul.bf16.gmra.mxu0 %v326
        %v398 = vpop.f32.mrf.mxu0
        %v399 = vadd.f32 %v299, %v398
        %v400 = vpop.f32.mrf.mxu0
        %v401 = vadd.f32 %v299, %v400
        %402 = vmatmul.bf16.gmra.mxu0 %v329
        %v403 = vpop.f32.mrf.mxu0
        %v404 = vadd.f32 %v299, %v403
        %v405 = vpop.f32.mrf.mxu0
        %v406 = vadd.f32 %v299, %v405
        %407 = vmatmul.bf16.gmra.mxu0 %v332
        %v408 = vpop.f32.mrf.mxu0
        %v409 = vadd.f32 %v299, %v408
        %v410 = vpop.f32.mrf.mxu0
        %v411 = vadd.f32 %v299, %v410
        %412 = vmatmul.bf16.gmra.mxu0 %v335
        %v413 = vpop.f32.mrf.mxu0
        %v414 = vadd.f32 %v299, %v413
        %v415 = vpop.f32.mrf.mxu0
        %v416 = vadd.f32 %v299, %v415
        %417 = vmatmul.bf16.gmra.mxu0 %v338
        %v418 = vpop.f32.mrf.mxu0
        %v419 = vadd.f32 %v299, %v418
        %v420 = vpop.f32.mrf.mxu0
        %v421 = vadd.f32 %v299, %v420
        %422 = vmatmul.bf16.gmra.mxu0 %v341
        %v423 = vpop.f32.mrf.mxu0
        %v424 = vadd.f32 %v299, %v423
        %v425 = vpop.f32.mrf.mxu0
        %v426 = vadd.f32 %v299, %v425
        %427 = vmatmul.bf16.gmra.mxu0 %v344
        %v428 = vpop.f32.mrf.mxu0
        %v429 = vadd.f32 %v299, %v428
        %v430 = vpop.f32.mrf.mxu0
        %v431 = vadd.f32 %v299, %v430
        %432 = vmatmul.bf16.gmra.mxu0 %v347
        %v433 = vpop.f32.mrf.mxu0
        %v434 = vadd.f32 %v299, %v433
        %v435 = vpop.f32.mrf.mxu0
        %v436 = vadd.f32 %v299, %v435
        %437 = vmatmul.bf16.gmra.mxu0 %v350
        %v438 = vpop.f32.mrf.mxu0
        %v439 = vadd.f32 %v299, %v438
        %v440 = vpop.f32.mrf.mxu0
        %v441 = vadd.f32 %v299, %v440
        %442 = vmatmul.bf16.gmra.mxu0 %v353
        %v443 = vpop.f32.mrf.mxu0
        %v444 = vadd.f32 %v299, %v443
        %v445 = vpop.f32.mrf.mxu0
        %v446 = vadd.f32 %v299, %v445
        %447 = vdwg.mxu0
        %v448 = vmax.f32 %v369, 0.0
        %v449 = vmax.f32 %v371, 0.0
        %v450 = vmax.f32 %v374, 0.0
        %v451 = vmax.f32 %v376, 0.0
        %v452 = vmax.f32 %v379, 0.0
        %v453 = vmax.f32 %v381, 0.0
        %v454 = vmax.f32 %v384, 0.0
        %v455 = vmax.f32 %v386, 0.0
        %v456 = vmax.f32 %v389, 0.0
        %v457 = vmax.f32 %v391, 0.0
        %v458 = vmax.f32 %v394, 0.0
        %v459 = vmax.f32 %v396, 0.0
        %v460 = vmax.f32 %v399, 0.0
        %v461 = vmax.f32 %v401, 0.0
        %v462 = vmax.f32 %v404, 0.0
        %v463 = vmax.f32 %v406, 0.0
        %v464 = vmax.f32 %v409, 0.0
        %v465 = vmax.f32 %v411, 0.0
        %v466 = vmax.f32 %v414, 0.0
        %v467 = vmax.f32 %v416, 0.0
        %v468 = vmax.f32 %v419, 0.0
        %v469 = vmax.f32 %v421, 0.0
        %v470 = vmax.f32 %v424, 0.0
        %v471 = vmax.f32 %v426, 0.0
        %v472 = vmax.f32 %v429, 0.0
        %v473 = vmax.f32 %v431, 0.0
        %v474 = vmax.f32 %v434, 0.0
        %v475 = vmax.f32 %v436, 0.0
        %v476 = vmax.f32 %v439, 0.0
        %v477 = vmax.f32 %v441, 0.0
        %v478 = vmax.f32 %v444, 0.0
        %v479 = vmax.f32 %v446, 0.0
        %v480 = vpack.c.bf16 %v449, %v448
        %v481 = vpack.c.bf16 %v451, %v450
        %v482 = vpack.c.bf16 %v453, %v452
        %v483 = vpack.c.bf16 %v455, %v454
        %v484 = vpack.c.bf16 %v457, %v456
        %v485 = vpack.c.bf16 %v459, %v458
        %v486 = vpack.c.bf16 %v461, %v460
        %v487 = vpack.c.bf16 %v463, %v462
        %v488 = vpack.c.bf16 %v465, %v464
        %v489 = vpack.c.bf16 %v467, %v466
        %v490 = vpack.c.bf16 %v469, %v468
        %v491 = vpack.c.bf16 %v471, %v470
        %v492 = vpack.c.bf16 %v473, %v472
        %v493 = vpack.c.bf16 %v475, %v474
        %v494 = vpack.c.bf16 %v477, %v476
        %v495 = vpack.c.bf16 %v479, %v478
        %v496 = vld [vmem:[%s3] sm:$0xf]
        %v497 = vld [vmem:[%s3 + $0x4] sm:$0xf]
        %v498 = vld [vmem:[%s3 + $0x8] sm:$0x3]
        %v499 = vld [vmem:[%s4] sm:$0x1]
        %v501 = vperm.slane %v499, 0
        %v506 = vunpack.c.l.b16 %v496
        %v507 = vunpack.c.l.b16 %v497
        %v508 = vunpack.c.l.b16 %v498
        %v509 = vpack.c.b16 %v507, %v506
        %v510 = vpack.c.b16 %v508, %v508
        %vm512 = vcmask 162816
        %v514 = vsel %vm512, %v480, 0
        %v517 = vsel %vm512, %v481, 0
        %v520 = vsel %vm512, %v482, 0
        %v523 = vsel %vm512, %v483, 0
        %v526 = vsel %vm512, %v484, 0
        %v529 = vsel %vm512, %v485, 0
        %v532 = vsel %vm512, %v486, 0
        %v535 = vsel %vm512, %v487, 0
        %v538 = vsel %vm512, %v488, 0
        %v541 = vsel %vm512, %v489, 0
        %v544 = vsel %vm512, %v490, 0
        %v547 = vsel %vm512, %v491, 0
        %v550 = vsel %vm512, %v492, 0
        %v553 = vsel %vm512, %v493, 0
        %v556 = vsel %vm512, %v494, 0
        %v559 = vsel %vm512, %v495, 0
        %vm561 = vcmask 1041408
        %v563 = vsel %vm561, %v510, 0
        %565 = vmatpush.bf16.msra.mxu0 0
        %566 = vmatpush.bf16.msra.mxu0 0
        %567 = vmatpush.bf16.msra.mxu0 0
        %568 = vmatpush.bf16.msra.mxu0 0
        %569 = vmatpush.bf16.msra.mxu0 0
        %570 = vmatpush.bf16.msra.mxu0 0
        %571 = vmatpush.bf16.msra.mxu0 %v563
        %572 = vmatpush.bf16.msra.mxu0 %v509
        %573 = vmatmul.bf16.gmra.mxu0 %v514
        %v574 = vpop.f32.mrf.mxu0
        %v575 = vadd.f32 %v501, %v574
        %v576 = vpop.f32.mrf.mxu0
        %v577 = vadd.f32 %v501, %v576
        %578 = vmatmul.bf16.gmra.mxu0 %v517
        %v579 = vpop.f32.mrf.mxu0
        %v580 = vadd.f32 %v501, %v579
        %v581 = vpop.f32.mrf.mxu0
        %v582 = vadd.f32 %v501, %v581
        %583 = vmatmul.bf16.gmra.mxu0 %v520
        %v584 = vpop.f32.mrf.mxu0
        %v585 = vadd.f32 %v501, %v584
        %v586 = vpop.f32.mrf.mxu0
        %v587 = vadd.f32 %v501, %v586
        %588 = vmatmul.bf16.gmra.mxu0 %v523
        %v589 = vpop.f32.mrf.mxu0
        %v590 = vadd.f32 %v501, %v589
        %v591 = vpop.f32.mrf.mxu0
        %v592 = vadd.f32 %v501, %v591
        %593 = vmatmul.bf16.gmra.mxu0 %v526
        %v594 = vpop.f32.mrf.mxu0
        %v595 = vadd.f32 %v501, %v594
        %v596 = vpop.f32.mrf.mxu0
        %v597 = vadd.f32 %v501, %v596
        %598 = vmatmul.bf16.gmra.mxu0 %v529
        %v599 = vpop.f32.mrf.mxu0
        %v600 = vadd.f32 %v501, %v599
        %v601 = vpop.f32.mrf.mxu0
        %v602 = vadd.f32 %v501, %v601
        %603 = vmatmul.bf16.gmra.mxu0 %v532
        %v604 = vpop.f32.mrf.mxu0
        %v605 = vadd.f32 %v501, %v604
        %v606 = vpop.f32.mrf.mxu0
        %v607 = vadd.f32 %v501, %v606
        %608 = vmatmul.bf16.gmra.mxu0 %v535
        %v609 = vpop.f32.mrf.mxu0
        %v610 = vadd.f32 %v501, %v609
        %v611 = vpop.f32.mrf.mxu0
        %v612 = vadd.f32 %v501, %v611
        %613 = vmatmul.bf16.gmra.mxu0 %v538
        %v614 = vpop.f32.mrf.mxu0
        %v615 = vadd.f32 %v501, %v614
        %v616 = vpop.f32.mrf.mxu0
        %v617 = vadd.f32 %v501, %v616
        %618 = vmatmul.bf16.gmra.mxu0 %v541
        %v619 = vpop.f32.mrf.mxu0
        %v620 = vadd.f32 %v501, %v619
        %v621 = vpop.f32.mrf.mxu0
        %v622 = vadd.f32 %v501, %v621
        %623 = vmatmul.bf16.gmra.mxu0 %v544
        %v624 = vpop.f32.mrf.mxu0
        %v625 = vadd.f32 %v501, %v624
        %v626 = vpop.f32.mrf.mxu0
        %v627 = vadd.f32 %v501, %v626
        %628 = vmatmul.bf16.gmra.mxu0 %v547
        %v629 = vpop.f32.mrf.mxu0
        %v630 = vadd.f32 %v501, %v629
        %v631 = vpop.f32.mrf.mxu0
        %v632 = vadd.f32 %v501, %v631
        %633 = vmatmul.bf16.gmra.mxu0 %v550
        %v634 = vpop.f32.mrf.mxu0
        %v635 = vadd.f32 %v501, %v634
        %v636 = vpop.f32.mrf.mxu0
        %v637 = vadd.f32 %v501, %v636
        %638 = vmatmul.bf16.gmra.mxu0 %v553
        %v639 = vpop.f32.mrf.mxu0
        %v640 = vadd.f32 %v501, %v639
        %v641 = vpop.f32.mrf.mxu0
        %v642 = vadd.f32 %v501, %v641
        %643 = vmatmul.bf16.gmra.mxu0 %v556
        %v644 = vpop.f32.mrf.mxu0
        %v645 = vadd.f32 %v501, %v644
        %v646 = vpop.f32.mrf.mxu0
        %v647 = vadd.f32 %v501, %v646
        %648 = vmatmul.bf16.gmra.mxu0 %v559
        %v649 = vpop.f32.mrf.mxu0
        %v650 = vadd.f32 %v501, %v649
        %v651 = vpop.f32.mrf.mxu0
        %v652 = vadd.f32 %v501, %v651
        %653 = vdwg.mxu0
        %v654 = vand.u32 2147483647, %v575
        %v655 = vand.u32 2147483647, %v577
        %v656 = vand.u32 2147483647, %v580
        %v657 = vand.u32 2147483647, %v582
        %v658 = vand.u32 2147483647, %v585
        %v659 = vand.u32 2147483647, %v587
        %v660 = vand.u32 2147483647, %v590
        %v661 = vand.u32 2147483647, %v592
        %v662 = vand.u32 2147483647, %v595
        %v663 = vand.u32 2147483647, %v597
        %v664 = vand.u32 2147483647, %v600
        %v665 = vand.u32 2147483647, %v602
        %v666 = vand.u32 2147483647, %v605
        %v667 = vand.u32 2147483647, %v607
        %v668 = vand.u32 2147483647, %v610
        %v669 = vand.u32 2147483647, %v612
        %v670 = vand.u32 2147483647, %v615
        %v671 = vand.u32 2147483647, %v617
        %v672 = vand.u32 2147483647, %v620
        %v673 = vand.u32 2147483647, %v622
        %v674 = vand.u32 2147483647, %v625
        %v675 = vand.u32 2147483647, %v627
        %v676 = vand.u32 2147483647, %v630
        %v677 = vand.u32 2147483647, %v632
        %v678 = vand.u32 2147483647, %v635
        %v679 = vand.u32 2147483647, %v637
        %v680 = vand.u32 2147483647, %v640
        %v681 = vand.u32 2147483647, %v642
        %v682 = vand.u32 2147483647, %v645
        %v683 = vand.u32 2147483647, %v647
        %v684 = vand.u32 2147483647, %v650
        %v685 = vand.u32 2147483647, %v652
        %v686 = vsub.f32 0.0, %v654
        %v687 = vsub.f32 0.0, %v655
        %v688 = vsub.f32 0.0, %v656
        %v689 = vsub.f32 0.0, %v657
        %v690 = vsub.f32 0.0, %v658
        %v691 = vsub.f32 0.0, %v659
        %v692 = vsub.f32 0.0, %v660
        %v693 = vsub.f32 0.0, %v661
        %v694 = vsub.f32 0.0, %v662
        %v695 = vsub.f32 0.0, %v663
        %v696 = vsub.f32 0.0, %v664
        %v697 = vsub.f32 0.0, %v665
        %v698 = vsub.f32 0.0, %v666
        %v699 = vsub.f32 0.0, %v667
        %v700 = vsub.f32 0.0, %v668
        %v701 = vsub.f32 0.0, %v669
        %v702 = vsub.f32 0.0, %v670
        %v703 = vsub.f32 0.0, %v671
        %v704 = vsub.f32 0.0, %v672
        %v705 = vsub.f32 0.0, %v673
        %v706 = vsub.f32 0.0, %v674
        %v707 = vsub.f32 0.0, %v675
        %v708 = vsub.f32 0.0, %v676
        %v709 = vsub.f32 0.0, %v677
        %v710 = vsub.f32 0.0, %v678
        %v711 = vsub.f32 0.0, %v679
        %v712 = vsub.f32 0.0, %v680
        %v713 = vsub.f32 0.0, %v681
        %v714 = vsub.f32 0.0, %v682
        %v715 = vsub.f32 0.0, %v683
        %v716 = vsub.f32 0.0, %v684
        %v717 = vsub.f32 0.0, %v685
        %v718 = vmul.f32 %v686, 1.442695
        %v719 = vpow.pop %v718
        %v720 = vmul.f32 %v687, 1.442695
        %v721 = vpow.pop %v720
        %v722 = vmul.f32 %v688, 1.442695
        %v723 = vpow.pop %v722
        %v724 = vmul.f32 %v689, 1.442695
        %v725 = vpow.pop %v724
        %v726 = vmul.f32 %v690, 1.442695
        %v727 = vpow.pop %v726
        %v728 = vmul.f32 %v691, 1.442695
        %v729 = vpow.pop %v728
        %v730 = vmul.f32 %v692, 1.442695
        %v731 = vpow.pop %v730
        %v732 = vmul.f32 %v693, 1.442695
        %v733 = vpow.pop %v732
        %v734 = vmul.f32 %v694, 1.442695
        %v735 = vpow.pop %v734
        %v736 = vmul.f32 %v695, 1.442695
        %v737 = vpow.pop %v736
        %v738 = vmul.f32 %v696, 1.442695
        %v739 = vpow.pop %v738
        %v740 = vmul.f32 %v697, 1.442695
        %v741 = vpow.pop %v740
        %v742 = vmul.f32 %v698, 1.442695
        %v743 = vpow.pop %v742
        %v744 = vmul.f32 %v699, 1.442695
        %v745 = vpow.pop %v744
        %v746 = vmul.f32 %v700, 1.442695
        %v747 = vpow.pop %v746
        %v748 = vmul.f32 %v701, 1.442695
        %v749 = vpow.pop %v748
        %v750 = vmul.f32 %v702, 1.442695
        %v751 = vpow.pop %v750
        %v752 = vmul.f32 %v703, 1.442695
        %v753 = vpow.pop %v752
        %v754 = vmul.f32 %v704, 1.442695
        %v755 = vpow.pop %v754
        %v756 = vmul.f32 %v705, 1.442695
        %v757 = vpow.pop %v756
        %v758 = vmul.f32 %v706, 1.442695
        %v759 = vpow.pop %v758
        %v760 = vmul.f32 %v707, 1.442695
        %v761 = vpow.pop %v760
        %v762 = vmul.f32 %v708, 1.442695
        %v763 = vpow.pop %v762
        %v764 = vmul.f32 %v709, 1.442695
        %v765 = vpow.pop %v764
        %v766 = vmul.f32 %v710, 1.442695
        %v767 = vpow.pop %v766
        %v768 = vmul.f32 %v711, 1.442695
        %v769 = vpow.pop %v768
        %v770 = vmul.f32 %v712, 1.442695
        %v771 = vpow.pop %v770
        %v772 = vmul.f32 %v713, 1.442695
        %v773 = vpow.pop %v772
        %v774 = vmul.f32 %v714, 1.442695
        %v775 = vpow.pop %v774
        %v776 = vmul.f32 %v715, 1.442695
        %v777 = vpow.pop %v776
        %v778 = vmul.f32 %v716, 1.442695
        %v779 = vpow.pop %v778
        %v780 = vmul.f32 %v717, 1.442695
        %v781 = vpow.pop %v780
        %v782 = vadd.f32 %v719, 1.0
        %v783 = vadd.f32 %v721, 1.0
        %v784 = vadd.f32 %v723, 1.0
        %v785 = vadd.f32 %v725, 1.0
        %v786 = vadd.f32 %v727, 1.0
        %v787 = vadd.f32 %v729, 1.0
        %v788 = vadd.f32 %v731, 1.0
        %v789 = vadd.f32 %v733, 1.0
        %v790 = vadd.f32 %v735, 1.0
        %v791 = vadd.f32 %v737, 1.0
        %v792 = vadd.f32 %v739, 1.0
        %v793 = vadd.f32 %v741, 1.0
        %v794 = vadd.f32 %v743, 1.0
        %v795 = vadd.f32 %v745, 1.0
        %v796 = vadd.f32 %v747, 1.0
        %v797 = vadd.f32 %v749, 1.0
        %v798 = vadd.f32 %v751, 1.0
        %v799 = vadd.f32 %v753, 1.0
        %v800 = vadd.f32 %v755, 1.0
        %v801 = vadd.f32 %v757, 1.0
        %v802 = vadd.f32 %v759, 1.0
        %v803 = vadd.f32 %v761, 1.0
        %v804 = vadd.f32 %v763, 1.0
        %v805 = vadd.f32 %v765, 1.0
        %v806 = vadd.f32 %v767, 1.0
        %v807 = vadd.f32 %v769, 1.0
        %v808 = vadd.f32 %v771, 1.0
        %v809 = vadd.f32 %v773, 1.0
        %v810 = vadd.f32 %v775, 1.0
        %v811 = vadd.f32 %v777, 1.0
        %v812 = vadd.f32 %v779, 1.0
        %v813 = vadd.f32 %v781, 1.0
        %v814 = vrcp.pop %v782
        %v815 = vrcp.pop %v783
        %v816 = vrcp.pop %v784
        %v817 = vrcp.pop %v785
        %v818 = vrcp.pop %v786
        %v819 = vrcp.pop %v787
        %v820 = vrcp.pop %v788
        %v821 = vrcp.pop %v789
        %v822 = vrcp.pop %v790
        %v823 = vrcp.pop %v791
        %v824 = vrcp.pop %v792
        %v825 = vrcp.pop %v793
        %v826 = vrcp.pop %v794
        %v827 = vrcp.pop %v795
        %v828 = vrcp.pop %v796
        %v829 = vrcp.pop %v797
        %v830 = vrcp.pop %v798
        %v831 = vrcp.pop %v799
        %v832 = vrcp.pop %v800
        %v833 = vrcp.pop %v801
        %v834 = vrcp.pop %v802
        %v835 = vrcp.pop %v803
        %v836 = vrcp.pop %v804
        %v837 = vrcp.pop %v805
        %v838 = vrcp.pop %v806
        %v839 = vrcp.pop %v807
        %v840 = vrcp.pop %v808
        %v841 = vrcp.pop %v809
        %v842 = vrcp.pop %v810
        %v843 = vrcp.pop %v811
        %v844 = vrcp.pop %v812
        %v845 = vrcp.pop %v813
        %vm846 = vcmp.ge.f32.partialorder %v575, 0.0
        %vm847 = vcmp.ge.f32.partialorder %v577, 0.0
        %vm848 = vcmp.ge.f32.partialorder %v580, 0.0
        %vm849 = vcmp.ge.f32.partialorder %v582, 0.0
        %vm850 = vcmp.ge.f32.partialorder %v585, 0.0
        %vm851 = vcmp.ge.f32.partialorder %v587, 0.0
        %vm852 = vcmp.ge.f32.partialorder %v590, 0.0
        %vm853 = vcmp.ge.f32.partialorder %v592, 0.0
        %vm854 = vcmp.ge.f32.partialorder %v595, 0.0
        %vm855 = vcmp.ge.f32.partialorder %v597, 0.0
        %vm856 = vcmp.ge.f32.partialorder %v600, 0.0
        %vm857 = vcmp.ge.f32.partialorder %v602, 0.0
        %vm858 = vcmp.ge.f32.partialorder %v605, 0.0
        %vm859 = vcmp.ge.f32.partialorder %v607, 0.0
        %vm860 = vcmp.ge.f32.partialorder %v610, 0.0
        %vm861 = vcmp.ge.f32.partialorder %v612, 0.0
        %vm862 = vcmp.ge.f32.partialorder %v615, 0.0
        %vm863 = vcmp.ge.f32.partialorder %v617, 0.0
        %vm864 = vcmp.ge.f32.partialorder %v620, 0.0
        %vm865 = vcmp.ge.f32.partialorder %v622, 0.0
        %vm866 = vcmp.ge.f32.partialorder %v625, 0.0
        %vm867 = vcmp.ge.f32.partialorder %v627, 0.0
        %vm868 = vcmp.ge.f32.partialorder %v630, 0.0
        %vm869 = vcmp.ge.f32.partialorder %v632, 0.0
        %vm870 = vcmp.ge.f32.partialorder %v635, 0.0
        %vm871 = vcmp.ge.f32.partialorder %v637, 0.0
        %vm872 = vcmp.ge.f32.partialorder %v640, 0.0
        %vm873 = vcmp.ge.f32.partialorder %v642, 0.0
        %vm874 = vcmp.ge.f32.partialorder %v645, 0.0
        %vm875 = vcmp.ge.f32.partialorder %v647, 0.0
        %vm876 = vcmp.ge.f32.partialorder %v650, 0.0
        %vm877 = vcmp.ge.f32.partialorder %v652, 0.0
        %v878 = vmul.f32 %v719, %v814
        %v879 = vmul.f32 %v721, %v815
        %v880 = vmul.f32 %v723, %v816
        %v881 = vmul.f32 %v725, %v817
        %v882 = vmul.f32 %v727, %v818
        %v883 = vmul.f32 %v729, %v819
        %v884 = vmul.f32 %v731, %v820
        %v885 = vmul.f32 %v733, %v821
        %v886 = vmul.f32 %v735, %v822
        %v887 = vmul.f32 %v737, %v823
        %v888 = vmul.f32 %v739, %v824
        %v889 = vmul.f32 %v741, %v825
        %v890 = vmul.f32 %v743, %v826
        %v891 = vmul.f32 %v745, %v827
        %v892 = vmul.f32 %v747, %v828
        %v893 = vmul.f32 %v749, %v829
        %v894 = vmul.f32 %v751, %v830
        %v895 = vmul.f32 %v753, %v831
        %v896 = vmul.f32 %v755, %v832
        %v897 = vmul.f32 %v757, %v833
        %v898 = vmul.f32 %v759, %v834
        %v899 = vmul.f32 %v761, %v835
        %v900 = vmul.f32 %v763, %v836
        %v901 = vmul.f32 %v765, %v837
        %v902 = vmul.f32 %v767, %v838
        %v903 = vmul.f32 %v769, %v839
        %v904 = vmul.f32 %v771, %v840
        %v905 = vmul.f32 %v773, %v841
        %v906 = vmul.f32 %v775, %v842
        %v907 = vmul.f32 %v777, %v843
        %v908 = vmul.f32 %v779, %v844
        %v909 = vmul.f32 %v781, %v845
        %v910 = vsel %vm846, %v814, %v878
        %v911 = vsel %vm847, %v815, %v879
        %v912 = vsel %vm848, %v816, %v880
        %v913 = vsel %vm849, %v817, %v881
        %v914 = vsel %vm850, %v818, %v882
        %v915 = vsel %vm851, %v819, %v883
        %v916 = vsel %vm852, %v820, %v884
        %v917 = vsel %vm853, %v821, %v885
        %v918 = vsel %vm854, %v822, %v886
        %v919 = vsel %vm855, %v823, %v887
        %v920 = vsel %vm856, %v824, %v888
        %v921 = vsel %vm857, %v825, %v889
        %v922 = vsel %vm858, %v826, %v890
        %v923 = vsel %vm859, %v827, %v891
        %v924 = vsel %vm860, %v828, %v892
        %v925 = vsel %vm861, %v829, %v893
        %v926 = vsel %vm862, %v830, %v894
        %v927 = vsel %vm863, %v831, %v895
        %v928 = vsel %vm864, %v832, %v896
        %v929 = vsel %vm865, %v833, %v897
        %v930 = vsel %vm866, %v834, %v898
        %v931 = vsel %vm867, %v835, %v899
        %v932 = vsel %vm868, %v836, %v900
        %v933 = vsel %vm869, %v837, %v901
        %v934 = vsel %vm870, %v838, %v902
        %v935 = vsel %vm871, %v839, %v903
        %v936 = vsel %vm872, %v840, %v904
        %v937 = vsel %vm873, %v841, %v905
        %v938 = vsel %vm874, %v842, %v906
        %v939 = vsel %vm875, %v843, %v907
        %v940 = vsel %vm876, %v844, %v908
        %v941 = vsel %vm877, %v845, %v909
        %v942 = vpack.c.bf16 %v910, %v910
        %v943 = vpack.c.bf16 %v911, %v911
        %v944 = vpack.c.bf16 %v912, %v912
        %v945 = vpack.c.bf16 %v913, %v913
        %v946 = vpack.c.bf16 %v914, %v914
        %v947 = vpack.c.bf16 %v915, %v915
        %v948 = vpack.c.bf16 %v916, %v916
        %v949 = vpack.c.bf16 %v917, %v917
        %v950 = vpack.c.bf16 %v918, %v918
        %v951 = vpack.c.bf16 %v919, %v919
        %v952 = vpack.c.bf16 %v920, %v920
        %v953 = vpack.c.bf16 %v921, %v921
        %v954 = vpack.c.bf16 %v922, %v922
        %v955 = vpack.c.bf16 %v923, %v923
        %v956 = vpack.c.bf16 %v924, %v924
        %v957 = vpack.c.bf16 %v925, %v925
        %v958 = vpack.c.bf16 %v926, %v926
        %v959 = vpack.c.bf16 %v927, %v927
        %v960 = vpack.c.bf16 %v928, %v928
        %v961 = vpack.c.bf16 %v929, %v929
        %v962 = vpack.c.bf16 %v930, %v930
        %v963 = vpack.c.bf16 %v931, %v931
        %v964 = vpack.c.bf16 %v932, %v932
        %v965 = vpack.c.bf16 %v933, %v933
        %v966 = vpack.c.bf16 %v934, %v934
        %v967 = vpack.c.bf16 %v935, %v935
        %v968 = vpack.c.bf16 %v936, %v936
        %v969 = vpack.c.bf16 %v937, %v937
        %v970 = vpack.c.bf16 %v938, %v938
        %v971 = vpack.c.bf16 %v939, %v939
        %v972 = vpack.c.bf16 %v940, %v940
        %v973 = vpack.c.bf16 %v941, %v941
        %vm974 = vcmask 52224
        %975 = vst.msk [vmem:[%s226] sm:$0xf] %vm974, %v942
        %976 = vst.msk [vmem:[%s226 + $0x4] sm:$0xf] %vm974, %v943
        %977 = vst.msk [vmem:[%s226 + $0x8] sm:$0xf] %vm974, %v944
        %978 = vst.msk [vmem:[%s226 + $0xc] sm:$0xf] %vm974, %v945
        %979 = vst.msk [vmem:[%s226 + $0x10] sm:$0xf] %vm974, %v946
        %980 = vst.msk [vmem:[%s226 + $0x14] sm:$0xf] %vm974, %v947
        %981 = vst.msk [vmem:[%s226 + $0x18] sm:$0xf] %vm974, %v948
        %982 = vst.msk [vmem:[%s226 + $0x1c] sm:$0xf] %vm974, %v949
        %983 = vst.msk [vmem:[%s226 + $0x20] sm:$0xf] %vm974, %v950
        %984 = vst.msk [vmem:[%s226 + $0x24] sm:$0xf] %vm974, %v951
        %985 = vst.msk [vmem:[%s226 + $0x28] sm:$0xf] %vm974, %v952
        %986 = vst.msk [vmem:[%s226 + $0x2c] sm:$0xf] %vm974, %v953
        %987 = vst.msk [vmem:[%s226 + $0x30] sm:$0xf] %vm974, %v954
        %988 = vst.msk [vmem:[%s226 + $0x34] sm:$0xf] %vm974, %v955
        %989 = vst.msk [vmem:[%s226 + $0x38] sm:$0xf] %vm974, %v956
        %990 = vst.msk [vmem:[%s226 + $0x3c] sm:$0xf] %vm974, %v957
        %991 = vst.msk [vmem:[%s226 + $0x40] sm:$0xf] %vm974, %v958
        %992 = vst.msk [vmem:[%s226 + $0x44] sm:$0xf] %vm974, %v959
        %993 = vst.msk [vmem:[%s226 + $0x48] sm:$0xf] %vm974, %v960
        %994 = vst.msk [vmem:[%s226 + $0x4c] sm:$0xf] %vm974, %v961
        %995 = vst.msk [vmem:[%s226 + $0x50] sm:$0xf] %vm974, %v962
        %996 = vst.msk [vmem:[%s226 + $0x54] sm:$0xf] %vm974, %v963
        %997 = vst.msk [vmem:[%s226 + $0x58] sm:$0xf] %vm974, %v964
        %998 = vst.msk [vmem:[%s226 + $0x5c] sm:$0xf] %vm974, %v965
        %999 = vst.msk [vmem:[%s226 + $0x60] sm:$0xf] %vm974, %v966
        %1000 = vst.msk [vmem:[%s226 + $0x64] sm:$0xf] %vm974, %v967
        %1001 = vst.msk [vmem:[%s226 + $0x68] sm:$0xf] %vm974, %v968
        %1002 = vst.msk [vmem:[%s226 + $0x6c] sm:$0xf] %vm974, %v969
        %1003 = vst.msk [vmem:[%s226 + $0x70] sm:$0xf] %vm974, %v970
        %1004 = vst.msk [vmem:[%s226 + $0x74] sm:$0xf] %vm974, %v971
        %1005 = vst.msk [vmem:[%s226 + $0x78] sm:$0xf] %vm974, %v972
        %1006 = vst.msk [vmem:[%s226 + $0x7c] sm:$0xf] %vm974, %v973
        %s1007 = sand.u32 %s134, 1
        %s1008 = sand.u32 %s134, 1
        %s1009 = smul.addr %s1008, 128
        %s1010 = scalar_lea.vmem [#allocation2], %s1009
        // Predicated region
        $region41: #{tpu_custom_call.1} parent=39 // pred_check
          %p1011 = pneg %p144
        $region42: #{tpu_custom_call.1} parent=39 // pred_check_branch
          %1013 = sbr.rel (%p1011) target = $region44
        $region43: #{tpu_custom_call.1} parent=39 // pred_region
          %s1014 = smul.u32 32, %s16
          %s1015 = ssub.s32 38, %s1014
          %p1016 = scmp.lt.s32.totalorder %s1015, 32
          %s1017 = scalar_select %p1016, %s1015, 32
          %s1018 = smul.u32 4, %s1017
          %p1019 = scmp.ne.s32.totalorder 0, %s1018
          %s1020 = smul.addr %s1014, 4
          %s1021 = scalar_lea.vmem %s5, %s1020
          // Predicated region
          $region45: #{tpu_custom_call.1} parent=43 // pred_check
            %p1022 = pneg %p1019
          $region46: #{tpu_custom_call.1} parent=43 // pred_check_branch
            %1024 = sbr.rel (%p1022) target = $region48
          $region47: #{tpu_custom_call.1} parent=43 // pred_region
            // Predicated region
            $region49: #{tpu_custom_call.1} parent=47 // pred_check
              _
            $region50: #{tpu_custom_call.1} parent=47 // pred_check_branch
              %1026 = sbr.rel target = $region52
            $region51: #{tpu_custom_call.1} parent=47 // pred_region
              // Predicated region
              $region71: #{tpu_custom_call.1} parent=51 // pred_check
                _
              $region72: #{tpu_custom_call.1} parent=51 // pred_check_branch
                %1138 = sbr.rel (0) target = $region74
              $region73: #{tpu_custom_call.1} parent=51 // pred_region
                %s1140 = ssub.s32 16, 1
                %s1141 = sshrl.u32 %s1017, 5
                // While loop
                $region75: #{tpu_custom_call.1} parent=73 // loop_pre_header
                  _
                $region76: #{tpu_custom_call.1} parent=73 // loop_header
                  %s1143 = sphi 0, %s1145
                  %p1144 = scmp.ge.s32.totalorder %s1143, %s1141
                  %s1148 = sphi 0, %s1217
                  %s1149 = sphi %s1010, %s1220
                  %s1150 = sphi %s1021, %s1221
                $region77: #{tpu_custom_call.1} parent=73 // loop_header_branch
                  %1147 = sbr.rel (%p1144) target = $region81
                $region78: #{tpu_custom_call.1} parent=73 // loop_body
                  %v1151 = vld [vmem:[%s1149] sm:%s1140]
                  %1152 = vst [vmem:[%s1150] sm:%s1140] %v1151
                  %v1153 = vld [vmem:[%s1149 + $0x4] sm:%s1140]
                  %1154 = vst [vmem:[%s1150 + $0x4] sm:%s1140] %v1153
                  %v1155 = vld [vmem:[%s1149 + $0x8] sm:%s1140]
                  %1156 = vst [vmem:[%s1150 + $0x8] sm:%s1140] %v1155
                  %v1157 = vld [vmem:[%s1149 + $0xc] sm:%s1140]
                  %1158 = vst [vmem:[%s1150 + $0xc] sm:%s1140] %v1157
                  %v1159 = vld [vmem:[%s1149 + $0x10] sm:%s1140]
                  %1160 = vst [vmem:[%s1150 + $0x10] sm:%s1140] %v1159
                  %v1161 = vld [vmem:[%s1149 + $0x14] sm:%s1140]
                  %1162 = vst [vmem:[%s1150 + $0x14] sm:%s1140] %v1161
                  %v1163 = vld [vmem:[%s1149 + $0x18] sm:%s1140]
                  %1164 = vst [vmem:[%s1150 + $0x18] sm:%s1140] %v1163
                  %v1165 = vld [vmem:[%s1149 + $0x1c] sm:%s1140]
                  %1166 = vst [vmem:[%s1150 + $0x1c] sm:%s1140] %v1165
                  %v1167 = vld [vmem:[%s1149 + $0x20] sm:%s1140]
                  %1168 = vst [vmem:[%s1150 + $0x20] sm:%s1140] %v1167
                  %v1169 = vld [vmem:[%s1149 + $0x24] sm:%s1140]
                  %1170 = vst [vmem:[%s1150 + $0x24] sm:%s1140] %v1169
                  %v1171 = vld [vmem:[%s1149 + $0x28] sm:%s1140]
                  %1172 = vst [vmem:[%s1150 + $0x28] sm:%s1140] %v1171
                  %v1173 = vld [vmem:[%s1149 + $0x2c] sm:%s1140]
                  %1174 = vst [vmem:[%s1150 + $0x2c] sm:%s1140] %v1173
                  %v1175 = vld [vmem:[%s1149 + $0x30] sm:%s1140]
                  %1176 = vst [vmem:[%s1150 + $0x30] sm:%s1140] %v1175
                  %v1177 = vld [vmem:[%s1149 + $0x34] sm:%s1140]
                  %1178 = vst [vmem:[%s1150 + $0x34] sm:%s1140] %v1177
                  %v1179 = vld [vmem:[%s1149 + $0x38] sm:%s1140]
                  %1180 = vst [vmem:[%s1150 + $0x38] sm:%s1140] %v1179
                  %v1181 = vld [vmem:[%s1149 + $0x3c] sm:%s1140]
                  %1182 = vst [vmem:[%s1150 + $0x3c] sm:%s1140] %v1181
                  %v1183 = vld [vmem:[%s1149 + $0x40] sm:%s1140]
                  %1184 = vst [vmem:[%s1150 + $0x40] sm:%s1140] %v1183
                  %v1185 = vld [vmem:[%s1149 + $0x44] sm:%s1140]
                  %1186 = vst [vmem:[%s1150 + $0x44] sm:%s1140] %v1185
                  %v1187 = vld [vmem:[%s1149 + $0x48] sm:%s1140]
                  %1188 = vst [vmem:[%s1150 + $0x48] sm:%s1140] %v1187
                  %v1189 = vld [vmem:[%s1149 + $0x4c] sm:%s1140]
                  %1190 = vst [vmem:[%s1150 + $0x4c] sm:%s1140] %v1189
                  %v1191 = vld [vmem:[%s1149 + $0x50] sm:%s1140]
                  %1192 = vst [vmem:[%s1150 + $0x50] sm:%s1140] %v1191
                  %v1193 = vld [vmem:[%s1149 + $0x54] sm:%s1140]
                  %1194 = vst [vmem:[%s1150 + $0x54] sm:%s1140] %v1193
                  %v1195 = vld [vmem:[%s1149 + $0x58] sm:%s1140]
                  %1196 = vst [vmem:[%s1150 + $0x58] sm:%s1140] %v1195
                  %v1197 = vld [vmem:[%s1149 + $0x5c] sm:%s1140]
                  %1198 = vst [vmem:[%s1150 + $0x5c] sm:%s1140] %v1197
                  %v1199 = vld [vmem:[%s1149 + $0x60] sm:%s1140]
                  %1200 = vst [vmem:[%s1150 + $0x60] sm:%s1140] %v1199
                  %v1201 = vld [vmem:[%s1149 + $0x64] sm:%s1140]
                  %1202 = vst [vmem:[%s1150 + $0x64] sm:%s1140] %v1201
                  %v1203 = vld [vmem:[%s1149 + $0x68] sm:%s1140]
                  %1204 = vst [vmem:[%s1150 + $0x68] sm:%s1140] %v1203
                  %v1205 = vld [vmem:[%s1149 + $0x6c] sm:%s1140]
                  %1206 = vst [vmem:[%s1150 + $0x6c] sm:%s1140] %v1205
                  %v1207 = vld [vmem:[%s1149 + $0x70] sm:%s1140]
                  %1208 = vst [vmem:[%s1150 + $0x70] sm:%s1140] %v1207
                  %v1209 = vld [vmem:[%s1149 + $0x74] sm:%s1140]
                  %1210 = vst [vmem:[%s1150 + $0x74] sm:%s1140] %v1209
                  %v1211 = vld [vmem:[%s1149 + $0x78] sm:%s1140]
                  %1212 = vst [vmem:[%s1150 + $0x78] sm:%s1140] %v1211
                  %v1213 = vld [vmem:[%s1149 + $0x7c] sm:%s1140]
                  %1214 = vst [vmem:[%s1150 + $0x7c] sm:%s1140] %v1213
                  %s1215 = sadd.s32 1, %s1148
                  %p1216 = scmp.ge.s32.totalorder %s1215, %s1141
                  %s1217 = scalar_select %p1216, 0, %s1215
                  %s1218 = smul.u32 %s1217, 128
                  %s1219 = smul.u32 %s1217, 128
                  %s1220 = scalar_lea.vmem %s1010, %s1218 [#allocation2]
                  %s1221 = scalar_lea.vmem %s1021, %s1219
                $region79: #{tpu_custom_call.1} parent=73 // loop_footer
                  %s1145 = sadd.s32 %s1143, 1
                $region80: #{tpu_custom_call.1} parent=73 // loop_footer_branch
                  %1142 = sbr.rel target = $region76
                $region81: #{tpu_custom_call.1} parent=73 // loop_exit
                  _
                %s1222 = sshrl.u32 %s1017, 5
                %s1223 = sand.u32 %s1017, 31
                %s1224 = smul.u32 %s1222, 32
                %s1225 = smul.u32 4, %s1224
                %s1226 = scalar_lea.vmem %s1010, %s1225 [#allocation2]
                %s1227 = smul.u32 4, %s1224
                %s1228 = scalar_lea.vmem %s1021, %s1227
                // While loop
                $region82: #{tpu_custom_call.1} parent=73 // loop_pre_header
                  _
                $region83: #{tpu_custom_call.1} parent=73 // loop_header
                  %s1230 = sphi 0, %s1232
                  %p1231 = scmp.ge.s32.totalorder %s1230, %s1223
                  %s1235 = sphi 0, %s1242
                  %s1236 = sphi %s1226, %s1245
                  %s1237 = sphi %s1228, %s1246
                $region84: #{tpu_custom_call.1} parent=73 // loop_header_branch
                  %1234 = sbr.rel (%p1231) target = $region88
                $region85: #{tpu_custom_call.1} parent=73 // loop_body
                  %v1238 = vld [vmem:[%s1236] sm:%s1140]
                  %1239 = vst [vmem:[%s1237] sm:%s1140] %v1238
                  %s1240 = sadd.s32 1, %s1235
                  %p1241 = scmp.ge.s32.totalorder %s1240, %s1223
                  %s1242 = scalar_select %p1241, 0, %s1240
                  %s1243 = smul.u32 %s1242, 4
                  %s1244 = smul.u32 %s1242, 4
                  %s1245 = scalar_lea.vmem %s1226, %s1243 [#allocation2]
                  %s1246 = scalar_lea.vmem %s1228, %s1244
                $region86: #{tpu_custom_call.1} parent=73 // loop_footer
                  %s1232 = sadd.s32 %s1230, 1
                $region87: #{tpu_custom_call.1} parent=73 // loop_footer_branch
                  %1229 = sbr.rel target = $region83
                $region88: #{tpu_custom_call.1} parent=73 // loop_exit
                  _
              $region74: #{tpu_custom_call.1} parent=51 // pred_fallthru
                _
            $region52: #{tpu_custom_call.1} parent=47 // pred_fallthru
              _
            // Predicated region
            $region53: #{tpu_custom_call.1} parent=47 // pred_check
              _
            $region54: #{tpu_custom_call.1} parent=47 // pred_check_branch
              %1028 = sbr.rel (0) target = $region56
            $region55: #{tpu_custom_call.1} parent=47 // pred_region
              %s1030 = ssub.s32 16, 1
              %s1031 = sshrl.u32 %s1017, 5
              // While loop
              $region57: #{tpu_custom_call.1} parent=55 // loop_pre_header
                _
              $region58: #{tpu_custom_call.1} parent=55 // loop_header
                %s1033 = sphi 0, %s1035
                %p1034 = scmp.ge.s32.totalorder %s1033, %s1031
                %s1038 = sphi 0, %s1107
                %s1039 = sphi %s1010, %s1110
                %s1040 = sphi %s1021, %s1111
              $region59: #{tpu_custom_call.1} parent=55 // loop_header_branch
                %1037 = sbr.rel (%p1034) target = $region63
              $region60: #{tpu_custom_call.1} parent=55 // loop_body
                %v1041 = vld [vmem:[%s1039] sm:%s1030]
                %1042 = vst [vmem:[%s1040] sm:%s1030] %v1041
                %v1043 = vld [vmem:[%s1039 + $0x4] sm:%s1030]
                %1044 = vst [vmem:[%s1040 + $0x4] sm:%s1030] %v1043
                %v1045 = vld [vmem:[%s1039 + $0x8] sm:%s1030]
                %1046 = vst [vmem:[%s1040 + $0x8] sm:%s1030] %v1045
                %v1047 = vld [vmem:[%s1039 + $0xc] sm:%s1030]
                %1048 = vst [vmem:[%s1040 + $0xc] sm:%s1030] %v1047
                %v1049 = vld [vmem:[%s1039 + $0x10] sm:%s1030]
                %1050 = vst [vmem:[%s1040 + $0x10] sm:%s1030] %v1049
                %v1051 = vld [vmem:[%s1039 + $0x14] sm:%s1030]
                %1052 = vst [vmem:[%s1040 + $0x14] sm:%s1030] %v1051
                %v1053 = vld [vmem:[%s1039 + $0x18] sm:%s1030]
                %1054 = vst [vmem:[%s1040 + $0x18] sm:%s1030] %v1053
                %v1055 = vld [vmem:[%s1039 + $0x1c] sm:%s1030]
                %1056 = vst [vmem:[%s1040 + $0x1c] sm:%s1030] %v1055
                %v1057 = vld [vmem:[%s1039 + $0x20] sm:%s1030]
                %1058 = vst [vmem:[%s1040 + $0x20] sm:%s1030] %v1057
                %v1059 = vld [vmem:[%s1039 + $0x24] sm:%s1030]
                %1060 = vst [vmem:[%s1040 + $0x24] sm:%s1030] %v1059
                %v1061 = vld [vmem:[%s1039 + $0x28] sm:%s1030]
                %1062 = vst [vmem:[%s1040 + $0x28] sm:%s1030] %v1061
                %v1063 = vld [vmem:[%s1039 + $0x2c] sm:%s1030]
                %1064 = vst [vmem:[%s1040 + $0x2c] sm:%s1030] %v1063
                %v1065 = vld [vmem:[%s1039 + $0x30] sm:%s1030]
                %1066 = vst [vmem:[%s1040 + $0x30] sm:%s1030] %v1065
                %v1067 = vld [vmem:[%s1039 + $0x34] sm:%s1030]
                %1068 = vst [vmem:[%s1040 + $0x34] sm:%s1030] %v1067
                %v1069 = vld [vmem:[%s1039 + $0x38] sm:%s1030]
                %1070 = vst [vmem:[%s1040 + $0x38] sm:%s1030] %v1069
                %v1071 = vld [vmem:[%s1039 + $0x3c] sm:%s1030]
                %1072 = vst [vmem:[%s1040 + $0x3c] sm:%s1030] %v1071
                %v1073 = vld [vmem:[%s1039 + $0x40] sm:%s1030]
                %1074 = vst [vmem:[%s1040 + $0x40] sm:%s1030] %v1073
                %v1075 = vld [vmem:[%s1039 + $0x44] sm:%s1030]
                %1076 = vst [vmem:[%s1040 + $0x44] sm:%s1030] %v1075
                %v1077 = vld [vmem:[%s1039 + $0x48] sm:%s1030]
                %1078 = vst [vmem:[%s1040 + $0x48] sm:%s1030] %v1077
                %v1079 = vld [vmem:[%s1039 + $0x4c] sm:%s1030]
                %1080 = vst [vmem:[%s1040 + $0x4c] sm:%s1030] %v1079
                %v1081 = vld [vmem:[%s1039 + $0x50] sm:%s1030]
                %1082 = vst [vmem:[%s1040 + $0x50] sm:%s1030] %v1081
                %v1083 = vld [vmem:[%s1039 + $0x54] sm:%s1030]
                %1084 = vst [vmem:[%s1040 + $0x54] sm:%s1030] %v1083
                %v1085 = vld [vmem:[%s1039 + $0x58] sm:%s1030]
                %1086 = vst [vmem:[%s1040 + $0x58] sm:%s1030] %v1085
                %v1087 = vld [vmem:[%s1039 + $0x5c] sm:%s1030]
                %1088 = vst [vmem:[%s1040 + $0x5c] sm:%s1030] %v1087
                %v1089 = vld [vmem:[%s1039 + $0x60] sm:%s1030]
                %1090 = vst [vmem:[%s1040 + $0x60] sm:%s1030] %v1089
                %v1091 = vld [vmem:[%s1039 + $0x64] sm:%s1030]
                %1092 = vst [vmem:[%s1040 + $0x64] sm:%s1030] %v1091
                %v1093 = vld [vmem:[%s1039 + $0x68] sm:%s1030]
                %1094 = vst [vmem:[%s1040 + $0x68] sm:%s1030] %v1093
                %v1095 = vld [vmem:[%s1039 + $0x6c] sm:%s1030]
                %1096 = vst [vmem:[%s1040 + $0x6c] sm:%s1030] %v1095
                %v1097 = vld [vmem:[%s1039 + $0x70] sm:%s1030]
                %1098 = vst [vmem:[%s1040 + $0x70] sm:%s1030] %v1097
                %v1099 = vld [vmem:[%s1039 + $0x74] sm:%s1030]
                %1100 = vst [vmem:[%s1040 + $0x74] sm:%s1030] %v1099
                %v1101 = vld [vmem:[%s1039 + $0x78] sm:%s1030]
                %1102 = vst [vmem:[%s1040 + $0x78] sm:%s1030] %v1101
                %v1103 = vld [vmem:[%s1039 + $0x7c] sm:%s1030]
                %1104 = vst [vmem:[%s1040 + $0x7c] sm:%s1030] %v1103
                %s1105 = sadd.s32 1, %s1038
                %p1106 = scmp.ge.s32.totalorder %s1105, %s1031
                %s1107 = scalar_select %p1106, 0, %s1105
                %s1108 = smul.u32 %s1107, 128
                %s1109 = smul.u32 %s1107, 128
                %s1110 = scalar_lea.vmem %s1010, %s1108 [#allocation2]
                %s1111 = scalar_lea.vmem %s1021, %s1109
              $region61: #{tpu_custom_call.1} parent=55 // loop_footer
                %s1035 = sadd.s32 %s1033, 1
              $region62: #{tpu_custom_call.1} parent=55 // loop_footer_branch
                %1032 = sbr.rel target = $region58
              $region63: #{tpu_custom_call.1} parent=55 // loop_exit
                _
              %s1112 = sshrl.u32 %s1017, 5
              %s1113 = sand.u32 %s1017, 31
              %s1114 = smul.u32 %s1112, 32
              %s1115 = smul.u32 4, %s1114
              %s1116 = scalar_lea.vmem %s1010, %s1115 [#allocation2]
              %s1117 = smul.u32 4, %s1114
              %s1118 = scalar_lea.vmem %s1021, %s1117
              // While loop
              $region64: #{tpu_custom_call.1} parent=55 // loop_pre_header
                _
              $region65: #{tpu_custom_call.1} parent=55 // loop_header
                %s1120 = sphi 0, %s1122
                %p1121 = scmp.ge.s32.totalorder %s1120, %s1113
                %s1125 = sphi 0, %s1132
                %s1126 = sphi %s1116, %s1135
                %s1127 = sphi %s1118, %s1136
              $region66: #{tpu_custom_call.1} parent=55 // loop_header_branch
                %1124 = sbr.rel (%p1121) target = $region70
              $region67: #{tpu_custom_call.1} parent=55 // loop_body
                %v1128 = vld [vmem:[%s1126] sm:%s1030]
                %1129 = vst [vmem:[%s1127] sm:%s1030] %v1128
                %s1130 = sadd.s32 1, %s1125
                %p1131 = scmp.ge.s32.totalorder %s1130, %s1113
                %s1132 = scalar_select %p1131, 0, %s1130
                %s1133 = smul.u32 %s1132, 4
                %s1134 = smul.u32 %s1132, 4
                %s1135 = scalar_lea.vmem %s1116, %s1133 [#allocation2]
                %s1136 = scalar_lea.vmem %s1118, %s1134
              $region68: #{tpu_custom_call.1} parent=55 // loop_footer
                %s1122 = sadd.s32 %s1120, 1
              $region69: #{tpu_custom_call.1} parent=55 // loop_footer_branch
                %1119 = sbr.rel target = $region65
              $region70: #{tpu_custom_call.1} parent=55 // loop_exit
                _
            $region56: #{tpu_custom_call.1} parent=47 // pred_fallthru
              _
          $region48: #{tpu_custom_call.1} parent=43 // pred_fallthru
            _
          %1247 = vnop
        $region44: #{tpu_custom_call.1} parent=39 // pred_fallthru
          _
      $region40: #{tpu_custom_call.1} parent=5 // pred_fallthru
        _
      %p1248 = scmp.le.s32.totalorder 2, %s11
      // Predicated region
      $region89: #{tpu_custom_call.1} parent=5 // pred_check
        %p1249 = pneg %p1248
      $region90: #{tpu_custom_call.1} parent=5 // pred_check_branch
        %1251 = sbr.rel (%p1249) target = $region92
      $region91: #{tpu_custom_call.1} parent=5 // pred_region
        %s1252 = ssub.s32 %s11, 2
        // Predicated region
        $region93: #{tpu_custom_call.1} parent=91 // pred_check
          %p1253 = pneg %p150
        $region94: #{tpu_custom_call.1} parent=91 // pred_check_branch
          %1255 = sbr.rel (%p1253) target = $region96
        $region95: #{tpu_custom_call.1} parent=91 // pred_region
          %s1256 = sand.u32 %s135, 1
          %s1257 = sand.u32 %s135, 1
          %s1258 = smul.addr %s1257, 128
          %s1259 = scalar_lea.vmem [#allocation2], %s1258
        $region96: #{tpu_custom_call.1} parent=91 // pred_fallthru
          _
      $region92: #{tpu_custom_call.1} parent=5 // pred_fallthru
        _
    $region6: #{tpu_custom_call.1} parent=1 // loop_footer
      %s15 = sadd.s32 1, %s11
    $region7: #{tpu_custom_call.1} parent=1 // loop_footer_branch
      %10 = sbr.rel target = $region3
    $region8: #{tpu_custom_call.1} parent=1 // loop_exit
      _

</llo_original>
